<compile_context>
chip_gen: v7x
topology: tpu7x:2x2x1
jax: 0.10.0
libtpu: 0.0.40
codegen_flags: <defaults>
</compile_context>

<pallas_src>
import jax
import jax.numpy as jnp
from jax.experimental import pallas as pl
from jax.experimental.pallas import tpu as pltpu

IN_FEATURES = 10
OUT_FEATURES = 10
MAX_TB = 16384           # rows per batch tile (16384 * 10 * 4B = 640 KiB)
PALLAS_MIN_BATCH = 1024  # below this a plain XLA fusion is strictly faster


def boring_kernel(x_ref, w_ref, b_ref, o_ref):
    # x_ref: (TB, 10)   w_ref: (10, 10) pre-transposed (in, out)   b_ref: (1, 10)
    # One narrow MXU matmul (f32 accumulate) + broadcast bias add on the VPU.
    y = jnp.dot(x_ref[...], w_ref[...], preferred_element_type=jnp.float32)
    o_ref[...] = (y + b_ref[...]).astype(o_ref.dtype)


def _round_up(n, m):
    return ((n + m - 1) // m) * m


def fuse_params(w0, b0, w1, b1):
    """Algebraic layer fusion, done ONCE at model init (not per call):
    sum_i(x @ wi.T + bi) == x @ (w0 + w1).T + (b0 + b1)."""
    w_sum_t = (w0.astype(jnp.float32) + w1.astype(jnp.float32)).T        # (in, out)
    b_sum = (b0.astype(jnp.float32) + b1.astype(jnp.float32)).reshape(1, OUT_FEATURES)
    return w_sum_t, b_sum


def _choose_tiling(batch):
    # >= 2 grid steps (keeps both v7x TensorCores busy under "parallel"),
    # tile <= MAX_TB, and row padding bounded by < 8 rows per tile.
    n_tiles = max(2, pl.cdiv(batch, MAX_TB))
    tb = _round_up(pl.cdiv(batch, n_tiles), 8)
    return tb, n_tiles * tb, n_tiles


def boring_model_forward(x, w_fused_t, b_fused):
    B = x.shape[0]
    w = w_fused_t if w_fused_t.dtype == x.dtype else w_fused_t.astype(x.dtype)

    if B < PALLAS_MIN_BATCH:
        # Tiny batches: launch + grid-step overhead dominates -> plain XLA fusion.
        y = jnp.dot(x, w, preferred_element_type=jnp.float32) + b_fused
        return y.astype(x.dtype)

    tb, b_pad, n_tiles = _choose_tiling(B)
    x_pad = x if b_pad == B else jnp.zeros((b_pad, IN_FEATURES), x.dtype).at[:B].set(x)

    itemsize = jnp.dtype(x.dtype).itemsize
    cost = pl.CostEstimate(
        flops=2 * b_pad * IN_FEATURES * OUT_FEATURES,
        transcendentals=0,
        bytes_accessed=(b_pad * IN_FEATURES * itemsize       # x read
                        + b_pad * OUT_FEATURES * itemsize    # out write
                        + w.size * itemsize                  # resident weights
                        + b_fused.size * 4),                 # resident bias
    )

    out = pl.pallas_call(
        boring_kernel,
        out_shape=jax.ShapeDtypeStruct((b_pad, OUT_FEATURES), x.dtype),
        grid_spec=pltpu.PrefetchScalarGridSpec(
            num_scalar_prefetch=0,
            grid=(n_tiles,),
            in_specs=[
                # x tile: last dim equals full array dim -> contiguous DMA.
                pl.BlockSpec((tb, IN_FEATURES), lambda i: (i, 0)),
                # weights/bias resident in VMEM across all grid steps.
                pl.BlockSpec((IN_FEATURES, OUT_FEATURES), lambda i: (0, 0)),
                pl.BlockSpec((1, OUT_FEATURES), lambda i: (0, 0)),
            ],
            out_specs=pl.BlockSpec((tb, OUT_FEATURES), lambda i: (i, 0)),
        ),
        compiler_params=pltpu.CompilerParams(
            dimension_semantics=("parallel",)),
        cost_estimate=cost,
    )(x_pad, w, b_fused)

    return out if b_pad == B else out[:B]


def init_linear_params(key, out_f, in_f):
    # Deterministic init mimicking nn.Linear default: U(-1/sqrt(in_f), 1/sqrt(in_f))
    kw, kb = jax.random.split(key)
    bound = 1.0 / (in_f ** 0.5)
    w = jax.random.uniform(kw, (out_f, in_f), jnp.float32, -bound, bound)
    b = jax.random.uniform(kb, (out_f,), jnp.float32, -bound, bound)
    return w, b


if __name__ == "__main__":
    key = jax.random.PRNGKey(0)
    kx, ks, k0, k1 = jax.random.split(key, 4)

    w0, b0 = init_linear_params(k0, OUT_FEATURES, IN_FEATURES)
    w1, b1 = init_linear_params(k1, OUT_FEATURES, IN_FEATURES)
    # Hoisted once at "model init" -- not recomputed per forward call.
    w_fused_t, b_fused = fuse_params(w0, b0, w1, b1)

    # 1) Pallas path: batch above the bail-out threshold and not tile-aligned
    #    (exercises the <8-row padding path and the 2-step parallel grid).
    B = 2055
    x = jax.random.normal(kx, (B, IN_FEATURES), jnp.float32)
    out = jax.block_until_ready(boring_model_forward(x, w_fused_t, b_fused))
    ref = (x @ w0.T + b0) + (x @ w1.T + b1)
    assert out.shape == (B, OUT_FEATURES)
    assert jnp.allclose(out, ref, atol=1e-4, rtol=1e-4)

    # 2) Small-batch path (XLA bail-out), original module-sized input.
    x_small = jax.random.normal(ks, (8, IN_FEATURES), jnp.float32)
    out_small = jax.block_until_ready(
        boring_model_forward(x_small, w_fused_t, b_fused))
    ref_small = (x_small @ w0.T + b0) + (x_small @ w1.T + b1)
    assert out_small.shape == (8, OUT_FEATURES)
    assert jnp.allclose(out_small, ref_small, atol=1e-4, rtol=1e-4)

    print("KERNEL_OK")
</pallas_src>

<mosaic_0001>
module attributes {stable_mosaic.version = 11 : i64} {
  func.func @boring_kernel(%arg0: i32, %arg1: memref<1032x10xf32, #tpu.memory_space<vmem>>, %arg2: memref<10x10xf32, #tpu.memory_space<vmem>>, %arg3: memref<1x10xf32, #tpu.memory_space<vmem>>, %arg4: memref<1032x10xf32, #tpu.memory_space<vmem>>) attributes {dimension_semantics = [#tpu.dimension_semantics<parallel>], iteration_bounds = array<i64: 2>, scalar_prefetch = 0 : i64, scratch_operands = 0 : i64, tpu.core_type = #tpu.core_type<tc>, window_params = [{transform_indices = @transform_0, window_bounds = array<i64: 1032, 10>}, {pipeline_mode = #tpu.pipeline_mode<synchronous>, transform_indices = @transform_1, window_bounds = array<i64: 10, 10>}, {pipeline_mode = #tpu.pipeline_mode<synchronous>, transform_indices = @transform_2, window_bounds = array<i64: 1, 10>}, {transform_indices = @transform_3, window_bounds = array<i64: 1032, 10>}]} {
    %c0 = arith.constant 0 : index
    %c0_0 = arith.constant 0 : index
    %0 = vector.load %arg1[%c0, %c0_0] : memref<1032x10xf32, #tpu.memory_space<vmem>>, vector<1032x10xf32>
    %c0_1 = arith.constant 0 : index
    %c0_2 = arith.constant 0 : index
    %1 = vector.load %arg2[%c0_1, %c0_2] : memref<10x10xf32, #tpu.memory_space<vmem>>, vector<10x10xf32>
    %cst = arith.constant dense<0.000000e+00> : vector<1032x10xf32>
    %2 = tpu.matmul %0, %1, %cst {dimension_numbers = #tpu.dot_dimension_numbers<[1], [0], [0], [1], [0, 0, 1, 1], [], []>} : vector<1032x10xf32>, vector<10x10xf32>, vector<1032x10xf32> -> vector<1032x10xf32>
    %c0_3 = arith.constant 0 : index
    %c0_4 = arith.constant 0 : index
    %3 = vector.load %arg3[%c0_3, %c0_4] : memref<1x10xf32, #tpu.memory_space<vmem>>, vector<1x10xf32>
    %4 = vector.broadcast %3 : vector<1x10xf32> to vector<1032x10xf32>
    %5 = arith.addf %2, %4 : vector<1032x10xf32>
    %c0_5 = arith.constant 0 : index
    %c0_6 = arith.constant 0 : index
    %6 = vector.load %arg4[%c0_5, %c0_6] : memref<1032x10xf32, #tpu.memory_space<vmem>>, vector<1032x10xf32>
    tpu.vector_store %arg4[%c0_5, %c0_6], %5 {strides = array<i32>} : memref<1032x10xf32, #tpu.memory_space<vmem>>, vector<1032x10xf32>,
    return
  }
  func.func @transform_0(%arg0: i32) -> (i32, i32) {
    %c0_i32 = arith.constant 0 : i32
    %c0_i32_0 = arith.constant 0 : i32
    return %arg0, %c0_i32 : i32, i32
  }
  func.func @transform_1(%arg0: i32) -> (i32, i32) {
    %c0_i32 = arith.constant 0 : i32
    %c0_i32_0 = arith.constant 0 : i32
    %c0_i32_1 = arith.constant 0 : i32
    return %c0_i32, %c0_i32_0 : i32, i32
  }
  func.func @transform_2(%arg0: i32) -> (i32, i32) {
    %c0_i32 = arith.constant 0 : i32
    %c0_i32_0 = arith.constant 0 : i32
    %c0_i32_1 = arith.constant 0 : i32
    return %c0_i32, %c0_i32_0 : i32, i32
  }
  func.func @transform_3(%arg0: i32) -> (i32, i32) {
    %c0_i32 = arith.constant 0 : i32
    %c0_i32_0 = arith.constant 0 : i32
    return %arg0, %c0_i32 : i32, i32
  }
}

</mosaic_0001>

<llo_original>
// kernel: tpu_custom_call.1
$region0: #{tpu_custom_call.1}
  #allocation0 [shape = 'u32[]', space=smem, size = 0x4, offset = 0x4, fixed_abs, tag = 'smem constant byte address 0x4 - core index']
  #allocation1 [shape = 'u32[144,128]{1,0:T(1,128)}', space=vmem, size = 0x12000, scoped, tag = 'internal scratch']
  %s0 = inlined_call_operand.vmem [shape: f32[2064,10], index: 0, kind: input, shape index: {}]
  %s1 = inlined_call_operand.vmem [shape: f32[10,10], index: 1, kind: input, shape index: {}]
  %s2 = inlined_call_operand.vmem [shape: f32[1,10], index: 2, kind: input, shape index: {}]
  %s3 = inlined_call_operand.vmem [shape: f32[2064,10], index: 3, kind: output, shape index: {}]
  %s4 = sld [smem:[#allocation0]]
  $region45: #{tpu_custom_call.1} parent=0
    _
  %s6 = ssub.s32 1, %s4
  %s7 = scalar_select 0, %s6, %s4
  loop: start=0, step=1, limit=4
  $region2: #{tpu_custom_call.1} parent=0 // loop_pre_header
    _
  $region3: #{tpu_custom_call.1} parent=0 // loop_header
    %s9 = sphi 0, %s13
    %p10 = scmp.ge.s32.totalorder %s9, 4
    %s19 = sphi 0, %s21
    %s22 = sphi 0, %s19
    %s23 = sphi 0, %s22
    %s39 = sphi 0, %s23
    %s43 = sphi 0, %s43
    %s45 = sphi 0, %s43
    %s46 = sphi 0, %s45
    %s60 = sphi 0, %s46
    %s64 = sphi 0, %s64
    %s66 = sphi 0, %s64
    %s67 = sphi 0, %s66
    %s81 = sphi 0, %s67
    %s87 = sphi 0, %s89
    %s90 = sphi 0, %s87
    %s91 = sphi 0, %s90
    %s107 = sphi 0, %s91
  $region4: #{tpu_custom_call.1} parent=0 // loop_header_branch
    %12 = sbr.rel (%p10) target = $region8
  $region5: #{tpu_custom_call.1} parent=0 // loop_body
    %s14 = ssub.s32 %s9, 1
    %s15 = ssub.s32 %s9, 2
    %s16 = sadd.s32 %s9, 1
    %s17 = ssub.s32 %s9, %s16
    %p18 = scmp.eq.s32.totalorder %s17, 0
    %s20 = sadd.s32 %s19, 1
    %s21 = scalar_select %p18, %s19, %s20
    %p24 = pneg %p18
    %p25 = scmp.eq.s32.totalorder %s9, 1
    %p26 = por %p24, %p25
    %p27 = scmp.ne.s32.totalorder %s19, %s22
    %p28 = scmp.eq.s32.totalorder %s9, 0
    %p29 = por %p27, %p28
    %p30 = scmp.ne.s32.totalorder %s19, %s22
    %p31 = scmp.eq.s32.totalorder %s14, 1
    %p32 = por %p30, %p31
    %p33 = scmp.ne.s32.totalorder %s22, %s23
    %p34 = scmp.eq.s32.totalorder %s14, 0
    %p35 = por %p33, %p34
    %p36 = scmp.ne.s32.totalorder %s22, %s23
    %p37 = scmp.eq.s32.totalorder %s15, 1
    %p38 = por %p36, %p37
    %p40 = scmp.ne.s32.totalorder %s23, %s39
    %p41 = scmp.eq.s32.totalorder %s15, 0
    %p42 = por %p40, %p41
    %s44 = sadd.s32 %s43, 1
    %p47 = scmp.eq.s32.totalorder %s9, 1
    %p48 = scmp.ne.s32.totalorder %s43, %s45
    %p49 = scmp.eq.s32.totalorder %s9, 0
    %p50 = por %p48, %p49
    %p51 = scmp.ne.s32.totalorder %s43, %s45
    %p52 = scmp.eq.s32.totalorder %s14, 1
    %p53 = por %p51, %p52
    %p54 = scmp.ne.s32.totalorder %s45, %s46
    %p55 = scmp.eq.s32.totalorder %s14, 0
    %p56 = por %p54, %p55
    %p57 = scmp.ne.s32.totalorder %s45, %s46
    %p58 = scmp.eq.s32.totalorder %s15, 1
    %p59 = por %p57, %p58
    %p61 = scmp.ne.s32.totalorder %s46, %s60
    %p62 = scmp.eq.s32.totalorder %s15, 0
    %p63 = por %p61, %p62
    %s65 = sadd.s32 %s64, 1
    %p68 = scmp.eq.s32.totalorder %s9, 1
    %p69 = scmp.ne.s32.totalorder %s64, %s66
    %p70 = scmp.eq.s32.totalorder %s9, 0
    %p71 = por %p69, %p70
    %p72 = scmp.ne.s32.totalorder %s64, %s66
    %p73 = scmp.eq.s32.totalorder %s14, 1
    %p74 = por %p72, %p73
    %p75 = scmp.ne.s32.totalorder %s66, %s67
    %p76 = scmp.eq.s32.totalorder %s14, 0
    %p77 = por %p75, %p76
    %p78 = scmp.ne.s32.totalorder %s66, %s67
    %p79 = scmp.eq.s32.totalorder %s15, 1
    %p80 = por %p78, %p79
    %p82 = scmp.ne.s32.totalorder %s67, %s81
    %p83 = scmp.eq.s32.totalorder %s15, 0
    %p84 = por %p82, %p83
    %s85 = ssub.s32 %s9, %s16
    %p86 = scmp.eq.s32.totalorder %s85, 0
    %s88 = sadd.s32 %s87, 1
    %s89 = scalar_select %p86, %s87, %s88
    %p92 = pneg %p86
    %p93 = scmp.eq.s32.totalorder %s9, 1
    %p94 = por %p92, %p93
    %p95 = scmp.ne.s32.totalorder %s87, %s90
    %p96 = scmp.eq.s32.totalorder %s9, 0
    %p97 = por %p95, %p96
    %p98 = scmp.ne.s32.totalorder %s87, %s90
    %p99 = scmp.eq.s32.totalorder %s14, 1
    %p100 = por %p98, %p99
    %p101 = scmp.ne.s32.totalorder %s90, %s91
    %p102 = scmp.eq.s32.totalorder %s14, 0
    %p103 = por %p101, %p102
    %p104 = scmp.ne.s32.totalorder %s90, %s91
    %p105 = scmp.eq.s32.totalorder %s15, 1
    %p106 = por %p104, %p105
    %p108 = scmp.ne.s32.totalorder %s91, %s107
    %p109 = scmp.eq.s32.totalorder %s15, 0
    %p110 = por %p108, %p109
    %p111 = scmp.le.s32.totalorder 1, %s9
    %p112 = scmp.lt.s32.totalorder %s9, 3
    %p113 = pnand %p111, %p112
    %p114 = pneg %p113
    // Predicated region
    $region9: #{tpu_custom_call.1} parent=5 // pred_check
      _
    $region10: #{tpu_custom_call.1} parent=5 // pred_check_branch
      %116 = sbr.rel (%p113) target = $region12
    $region11: #{tpu_custom_call.1} parent=5 // pred_region
      %s117 = ssub.s32 %s9, 1
      // Predicated region
      $region13: #{tpu_custom_call.1} parent=11 // pred_check
        %p118 = pneg %p56
      $region14: #{tpu_custom_call.1} parent=11 // pred_check_branch
        %120 = sbr.rel (%p118) target = $region16
      $region15: #{tpu_custom_call.1} parent=11 // pred_region
        _
      $region16: #{tpu_custom_call.1} parent=11 // pred_fallthru
        _
      // Predicated region
      $region17: #{tpu_custom_call.1} parent=11 // pred_check
        %p121 = pneg %p77
      $region18: #{tpu_custom_call.1} parent=11 // pred_check_branch
        %123 = sbr.rel (%p121) target = $region20
      $region19: #{tpu_custom_call.1} parent=11 // pred_region
        _
      $region20: #{tpu_custom_call.1} parent=11 // pred_fallthru
        _
    $region12: #{tpu_custom_call.1} parent=5 // pred_fallthru
      _
    %p124 = scmp.lt.s32.totalorder %s9, 2
    // Predicated region
    $region21: #{tpu_custom_call.1} parent=5 // pred_check
      %p125 = pneg %p124
    $region22: #{tpu_custom_call.1} parent=5 // pred_check_branch
      %127 = sbr.rel (%p125) target = $region24
    $region23: #{tpu_custom_call.1} parent=5 // pred_region
      // Predicated region
      $region25: #{tpu_custom_call.1} parent=23 // pred_check
        %p128 = pneg %p29
      $region26: #{tpu_custom_call.1} parent=23 // pred_check_branch
        %130 = sbr.rel (%p128) target = $region28
      $region27: #{tpu_custom_call.1} parent=23 // pred_region
        %s131 = smul.u32 129, %s9
        %p132 = scmp.lt.s32.totalorder %s131, 257
        %s133 = scalar_select %p132, %s131, 257
        %s134 = smul.addr %s133, 8
        %s135 = scalar_lea.vmem %s0, %s134
        %s136 = smul.u32 129, %s9
      $region28: #{tpu_custom_call.1} parent=23 // pred_fallthru
        _
    $region24: #{tpu_custom_call.1} parent=5 // pred_fallthru
      _
    %p137 = scmp.le.s32.totalorder 1, %s9
    %p138 = scmp.lt.s32.totalorder %s9, 3
    %p139 = pnand %p137, %p138
    %p140 = pneg %p139
    // Predicated region
    $region29: #{tpu_custom_call.1} parent=5 // pred_check
      _
    $region30: #{tpu_custom_call.1} parent=5 // pred_check_branch
      %142 = sbr.rel (%p139) target = $region32
    $region31: #{tpu_custom_call.1} parent=5 // pred_region
      %s143 = ssub.s32 %s9, 1
      %s144 = smul.u32 129, %s14
      %p145 = scmp.lt.s32.totalorder %s144, 257
      %s146 = scalar_select %p145, %s144, 257
      %s147 = smul.addr %s146, 8
      %s148 = scalar_lea.vmem %s0, %s147
      %p149 = pneg %p35
      %p150 = pneg %p32
      %p151 = pneg %p56
      %p152 = pneg %p53
      %p153 = pneg %p77
      %p154 = pneg %p74
      %p155 = pneg %p103
      %p156 = pneg %p100
      %s157 = smul.u32 129, %s14
      %p158 = scmp.lt.s32.totalorder %s157, 257
      %s159 = scalar_select %p158, %s157, 257
      %s160 = smul.addr %s159, 8
      %s161 = scalar_lea.vmem %s3, %s160
      %s162 = smul.u32 129, %s14
      %p163 = scmp.lt.s32.totalorder %s162, 257
      %s164 = scalar_select %p163, %s162, 257
      %s165 = smul.addr %s164, 8
      %s166 = scalar_lea.vmem %s0, %s165
      %s167 = smul.u32 129, %s14
      %s168 = smul.u32 129, %s14
      %p169 = scmp.lt.s32.totalorder %s168, 257
      %s170 = scalar_select %p169, %s168, 257
      %s171 = smul.addr %s170, 8
      %s172 = scalar_lea.vmem %s3, %s171
      %s173 = smul.u32 129, %s14
      %v174 = vld [vmem:[%s166] sm:$0xff]
      %v175 = vld [vmem:[%s166 + $0x8] sm:$0xff]
      %v176 = vld [vmem:[%s166 + $0x10] sm:$0xff]
      %v177 = vld [vmem:[%s166 + $0x18] sm:$0xff]
      %v178 = vld [vmem:[%s166 + $0x20] sm:$0xff]
      %v179 = vld [vmem:[%s166 + $0x28] sm:$0xff]
      %v180 = vld [vmem:[%s166 + $0x30] sm:$0xff]
      %v181 = vld [vmem:[%s166 + $0x38] sm:$0xff]
      %v182 = vld [vmem:[%s166 + $0x40] sm:$0xff]
      %v183 = vld [vmem:[%s166 + $0x48] sm:$0xff]
      %v184 = vld [vmem:[%s166 + $0x50] sm:$0xff]
      %v185 = vld [vmem:[%s166 + $0x58] sm:$0xff]
      %v186 = vld [vmem:[%s166 + $0x60] sm:$0xff]
      %v187 = vld [vmem:[%s166 + $0x68] sm:$0xff]
      %v188 = vld [vmem:[%s166 + $0x70] sm:$0xff]
      %v189 = vld [vmem:[%s166 + $0x78] sm:$0xff]
      %v190 = vld [vmem:[%s166 + $0x80] sm:$0xff]
      %v191 = vld [vmem:[%s166 + $0x88] sm:$0xff]
      %v192 = vld [vmem:[%s166 + $0x90] sm:$0xff]
      %v193 = vld [vmem:[%s166 + $0x98] sm:$0xff]
      %v194 = vld [vmem:[%s166 + $0xa0] sm:$0xff]
      %v195 = vld [vmem:[%s166 + $0xa8] sm:$0xff]
      %v196 = vld [vmem:[%s166 + $0xb0] sm:$0xff]
      %v197 = vld [vmem:[%s166 + $0xb8] sm:$0xff]
      %v198 = vld [vmem:[%s166 + $0xc0] sm:$0xff]
      %v199 = vld [vmem:[%s166 + $0xc8] sm:$0xff]
      %v200 = vld [vmem:[%s166 + $0xd0] sm:$0xff]
      %v201 = vld [vmem:[%s166 + $0xd8] sm:$0xff]
      %v202 = vld [vmem:[%s166 + $0xe0] sm:$0xff]
      %v203 = vld [vmem:[%s166 + $0xe8] sm:$0xff]
      %v204 = vld [vmem:[%s166 + $0xf0] sm:$0xff]
      %v205 = vld [vmem:[%s166 + $0xf8] sm:$0xff]
      %v206 = vld [vmem:[%s166 + $0x100] sm:$0xff]
      %v207 = vld [vmem:[%s166 + $0x108] sm:$0xff]
      %v208 = vld [vmem:[%s166 + $0x110] sm:$0xff]
      %v209 = vld [vmem:[%s166 + $0x118] sm:$0xff]
      %v210 = vld [vmem:[%s166 + $0x120] sm:$0xff]
      %v211 = vld [vmem:[%s166 + $0x128] sm:$0xff]
      %v212 = vld [vmem:[%s166 + $0x130] sm:$0xff]
      %v213 = vld [vmem:[%s166 + $0x138] sm:$0xff]
      %v214 = vld [vmem:[%s166 + $0x140] sm:$0xff]
      %v215 = vld [vmem:[%s166 + $0x148] sm:$0xff]
      %v216 = vld [vmem:[%s166 + $0x150] sm:$0xff]
      %v217 = vld [vmem:[%s166 + $0x158] sm:$0xff]
      %v218 = vld [vmem:[%s166 + $0x160] sm:$0xff]
      %v219 = vld [vmem:[%s166 + $0x168] sm:$0xff]
      %v220 = vld [vmem:[%s166 + $0x170] sm:$0xff]
      %v221 = vld [vmem:[%s166 + $0x178] sm:$0xff]
      %v222 = vld [vmem:[%s166 + $0x180] sm:$0xff]
      %v223 = vld [vmem:[%s166 + $0x188] sm:$0xff]
      %v224 = vld [vmem:[%s166 + $0x190] sm:$0xff]
      %v225 = vld [vmem:[%s166 + $0x198] sm:$0xff]
      %v226 = vld [vmem:[%s166 + $0x1a0] sm:$0xff]
      %v227 = vld [vmem:[%s166 + $0x1a8] sm:$0xff]
      %v228 = vld [vmem:[%s166 + $0x1b0] sm:$0xff]
      %v229 = vld [vmem:[%s166 + $0x1b8] sm:$0xff]
      %v230 = vld [vmem:[%s166 + $0x1c0] sm:$0xff]
      %v231 = vld [vmem:[%s166 + $0x1c8] sm:$0xff]
      %v232 = vld [vmem:[%s166 + $0x1d0] sm:$0xff]
      %v233 = vld [vmem:[%s166 + $0x1d8] sm:$0xff]
      %v234 = vld [vmem:[%s166 + $0x1e0] sm:$0xff]
      %v235 = vld [vmem:[%s166 + $0x1e8] sm:$0xff]
      %v236 = vld [vmem:[%s166 + $0x1f0] sm:$0xff]
      %v237 = vld [vmem:[%s166 + $0x1f8] sm:$0xff]
      %v238 = vld [vmem:[%s166 + $0x200] sm:$0xff]
      %v239 = vld [vmem:[%s166 + $0x208] sm:$0xff]
      %v240 = vld [vmem:[%s166 + $0x210] sm:$0xff]
      %v241 = vld [vmem:[%s166 + $0x218] sm:$0xff]
      %v242 = vld [vmem:[%s166 + $0x220] sm:$0xff]
      %v243 = vld [vmem:[%s166 + $0x228] sm:$0xff]
      %v244 = vld [vmem:[%s166 + $0x230] sm:$0xff]
      %v245 = vld [vmem:[%s166 + $0x238] sm:$0xff]
      %v246 = vld [vmem:[%s166 + $0x240] sm:$0xff]
      %v247 = vld [vmem:[%s166 + $0x248] sm:$0xff]
      %v248 = vld [vmem:[%s166 + $0x250] sm:$0xff]
      %v249 = vld [vmem:[%s166 + $0x258] sm:$0xff]
      %v250 = vld [vmem:[%s166 + $0x260] sm:$0xff]
      %v251 = vld [vmem:[%s166 + $0x268] sm:$0xff]
      %v252 = vld [vmem:[%s166 + $0x270] sm:$0xff]
      %v253 = vld [vmem:[%s166 + $0x278] sm:$0xff]
      %v254 = vld [vmem:[%s166 + $0x280] sm:$0xff]
      %v255 = vld [vmem:[%s166 + $0x288] sm:$0xff]
      %v256 = vld [vmem:[%s166 + $0x290] sm:$0xff]
      %v257 = vld [vmem:[%s166 + $0x298] sm:$0xff]
      %v258 = vld [vmem:[%s166 + $0x2a0] sm:$0xff]
      %v259 = vld [vmem:[%s166 + $0x2a8] sm:$0xff]
      %v260 = vld [vmem:[%s166 + $0x2b0] sm:$0xff]
      %v261 = vld [vmem:[%s166 + $0x2b8] sm:$0xff]
      %v262 = vld [vmem:[%s166 + $0x2c0] sm:$0xff]
      %v263 = vld [vmem:[%s166 + $0x2c8] sm:$0xff]
      %v264 = vld [vmem:[%s166 + $0x2d0] sm:$0xff]
      %v265 = vld [vmem:[%s166 + $0x2d8] sm:$0xff]
      %v266 = vld [vmem:[%s166 + $0x2e0] sm:$0xff]
      %v267 = vld [vmem:[%s166 + $0x2e8] sm:$0xff]
      %v268 = vld [vmem:[%s166 + $0x2f0] sm:$0xff]
      %v269 = vld [vmem:[%s166 + $0x2f8] sm:$0xff]
      %v270 = vld [vmem:[%s166 + $0x300] sm:$0xff]
      %v271 = vld [vmem:[%s166 + $0x308] sm:$0xff]
      %v272 = vld [vmem:[%s166 + $0x310] sm:$0xff]
      %v273 = vld [vmem:[%s166 + $0x318] sm:$0xff]
      %v274 = vld [vmem:[%s166 + $0x320] sm:$0xff]
      %v275 = vld [vmem:[%s166 + $0x328] sm:$0xff]
      %v276 = vld [vmem:[%s166 + $0x330] sm:$0xff]
      %v277 = vld [vmem:[%s166 + $0x338] sm:$0xff]
      %v278 = vld [vmem:[%s166 + $0x340] sm:$0xff]
      %v279 = vld [vmem:[%s166 + $0x348] sm:$0xff]
      %v280 = vld [vmem:[%s166 + $0x350] sm:$0xff]
      %v281 = vld [vmem:[%s166 + $0x358] sm:$0xff]
      %v282 = vld [vmem:[%s166 + $0x360] sm:$0xff]
      %v283 = vld [vmem:[%s166 + $0x368] sm:$0xff]
      %v284 = vld [vmem:[%s166 + $0x370] sm:$0xff]
      %v285 = vld [vmem:[%s166 + $0x378] sm:$0xff]
      %v286 = vld [vmem:[%s166 + $0x380] sm:$0xff]
      %v287 = vld [vmem:[%s166 + $0x388] sm:$0xff]
      %v288 = vld [vmem:[%s166 + $0x390] sm:$0xff]
      %v289 = vld [vmem:[%s166 + $0x398] sm:$0xff]
      %v290 = vld [vmem:[%s166 + $0x3a0] sm:$0xff]
      %v291 = vld [vmem:[%s166 + $0x3a8] sm:$0xff]
      %v292 = vld [vmem:[%s166 + $0x3b0] sm:$0xff]
      %v293 = vld [vmem:[%s166 + $0x3b8] sm:$0xff]
      %v294 = vld [vmem:[%s166 + $0x3c0] sm:$0xff]
      %v295 = vld [vmem:[%s166 + $0x3c8] sm:$0xff]
      %v296 = vld [vmem:[%s166 + $0x3d0] sm:$0xff]
      %v297 = vld [vmem:[%s166 + $0x3d8] sm:$0xff]
      %v298 = vld [vmem:[%s166 + $0x3e0] sm:$0xff]
      %v299 = vld [vmem:[%s166 + $0x3e8] sm:$0xff]
      %v300 = vld [vmem:[%s166 + $0x3f0] sm:$0xff]
      %v301 = vld [vmem:[%s166 + $0x3f8] sm:$0xff]
      %v302 = vld [vmem:[%s166 + $0x400] sm:$0xff]
      %v303 = vld [vmem:[%s1] sm:$0xff]
      %v304 = vld [vmem:[%s1 + $0x8] sm:$0x3]
      %v305 = vld [vmem:[%s2] sm:$0x1]
      %v307 = vlaneseq
      %v308 = vshrl.u32 %v307, 7
      %v309 = vsub.s32 0, %v308
      %v310 = vrot.slane %v305, %v309
      %vm312 = vcmask 80896
      %v314 = vsel %vm312, %v174, 0
      %v317 = vsel %vm312, %v175, 0
      %v320 = vsel %vm312, %v176, 0
      %v323 = vsel %vm312, %v177, 0
      %v326 = vsel %vm312, %v178, 0
      %v329 = vsel %vm312, %v179, 0
      %v332 = vsel %vm312, %v180, 0
      %v335 = vsel %vm312, %v181, 0
      %v338 = vsel %vm312, %v182, 0
      %v341 = vsel %vm312, %v183, 0
      %v344 = vsel %vm312, %v184, 0
      %v347 = vsel %vm312, %v185, 0
      %v350 = vsel %vm312, %v186, 0
      %v353 = vsel %vm312, %v187, 0
      %v356 = vsel %vm312, %v188, 0
      %v359 = vsel %vm312, %v189, 0
      %v362 = vsel %vm312, %v190, 0
      %v365 = vsel %vm312, %v191, 0
      %v368 = vsel %vm312, %v192, 0
      %v371 = vsel %vm312, %v193, 0
      %v374 = vsel %vm312, %v194, 0
      %v377 = vsel %vm312, %v195, 0
      %v380 = vsel %vm312, %v196, 0
      %v383 = vsel %vm312, %v197, 0
      %v386 = vsel %vm312, %v198, 0
      %v389 = vsel %vm312, %v199, 0
      %v392 = vsel %vm312, %v200, 0
      %v395 = vsel %vm312, %v201, 0
      %v398 = vsel %vm312, %v202, 0
      %v401 = vsel %vm312, %v203, 0
      %v404 = vsel %vm312, %v204, 0
      %v407 = vsel %vm312, %v205, 0
      %v410 = vsel %vm312, %v206, 0
      %v413 = vsel %vm312, %v207, 0
      %v416 = vsel %vm312, %v208, 0
      %v419 = vsel %vm312, %v209, 0
      %v422 = vsel %vm312, %v210, 0
      %v425 = vsel %vm312, %v211, 0
      %v428 = vsel %vm312, %v212, 0
      %v431 = vsel %vm312, %v213, 0
      %v434 = vsel %vm312, %v214, 0
      %v437 = vsel %vm312, %v215, 0
      %v440 = vsel %vm312, %v216, 0
      %v443 = vsel %vm312, %v217, 0
      %v446 = vsel %vm312, %v218, 0
      %v449 = vsel %vm312, %v219, 0
      %v452 = vsel %vm312, %v220, 0
      %v455 = vsel %vm312, %v221, 0
      %v458 = vsel %vm312, %v222, 0
      %v461 = vsel %vm312, %v223, 0
      %v464 = vsel %vm312, %v224, 0
      %v467 = vsel %vm312, %v225, 0
      %v470 = vsel %vm312, %v226, 0
      %v473 = vsel %vm312, %v227, 0
      %v476 = vsel %vm312, %v228, 0
      %v479 = vsel %vm312, %v229, 0
      %v482 = vsel %vm312, %v230, 0
      %v485 = vsel %vm312, %v231, 0
      %v488 = vsel %vm312, %v232, 0
      %v491 = vsel %vm312, %v233, 0
      %v494 = vsel %vm312, %v234, 0
      %v497 = vsel %vm312, %v235, 0
      %v500 = vsel %vm312, %v236, 0
      %v503 = vsel %vm312, %v237, 0
      %v506 = vsel %vm312, %v238, 0
      %v509 = vsel %vm312, %v239, 0
      %v512 = vsel %vm312, %v240, 0
      %v515 = vsel %vm312, %v241, 0
      %v518 = vsel %vm312, %v242, 0
      %v521 = vsel %vm312, %v243, 0
      %v524 = vsel %vm312, %v244, 0
      %v527 = vsel %vm312, %v245, 0
      %v530 = vsel %vm312, %v246, 0
      %v533 = vsel %vm312, %v247, 0
      %v536 = vsel %vm312, %v248, 0
      %v539 = vsel %vm312, %v249, 0
      %v542 = vsel %vm312, %v250, 0
      %v545 = vsel %vm312, %v251, 0
      %v548 = vsel %vm312, %v252, 0
      %v551 = vsel %vm312, %v253, 0
      %v554 = vsel %vm312, %v254, 0
      %v557 = vsel %vm312, %v255, 0
      %v560 = vsel %vm312, %v256, 0
      %v563 = vsel %vm312, %v257, 0
      %v566 = vsel %vm312, %v258, 0
      %v569 = vsel %vm312, %v259, 0
      %v572 = vsel %vm312, %v260, 0
      %v575 = vsel %vm312, %v261, 0
      %v578 = vsel %vm312, %v262, 0
      %v581 = vsel %vm312, %v263, 0
      %v584 = vsel %vm312, %v264, 0
      %v587 = vsel %vm312, %v265, 0
      %v590 = vsel %vm312, %v266, 0
      %v593 = vsel %vm312, %v267, 0
      %v596 = vsel %vm312, %v268, 0
      %v599 = vsel %vm312, %v269, 0
      %v602 = vsel %vm312, %v270, 0
      %v605 = vsel %vm312, %v271, 0
      %v608 = vsel %vm312, %v272, 0
      %v611 = vsel %vm312, %v273, 0
      %v614 = vsel %vm312, %v274, 0
      %v617 = vsel %vm312, %v275, 0
      %v620 = vsel %vm312, %v276, 0
      %v623 = vsel %vm312, %v277, 0
      %v626 = vsel %vm312, %v278, 0
      %v629 = vsel %vm312, %v279, 0
      %v632 = vsel %vm312, %v280, 0
      %v635 = vsel %vm312, %v281, 0
      %v638 = vsel %vm312, %v282, 0
      %v641 = vsel %vm312, %v283, 0
      %v644 = vsel %vm312, %v284, 0
      %v647 = vsel %vm312, %v285, 0
      %v650 = vsel %vm312, %v286, 0
      %v653 = vsel %vm312, %v287, 0
      %v656 = vsel %vm312, %v288, 0
      %v659 = vsel %vm312, %v289, 0
      %v662 = vsel %vm312, %v290, 0
      %v665 = vsel %vm312, %v291, 0
      %v668 = vsel %vm312, %v292, 0
      %v671 = vsel %vm312, %v293, 0
      %v674 = vsel %vm312, %v294, 0
      %v677 = vsel %vm312, %v295, 0
      %v680 = vsel %vm312, %v296, 0
      %v683 = vsel %vm312, %v297, 0
      %v686 = vsel %vm312, %v298, 0
      %v689 = vsel %vm312, %v299, 0
      %v692 = vsel %vm312, %v300, 0
      %v695 = vsel %vm312, %v301, 0
      %v698 = vsel %vm312, %v302, 0
      %vm700 = vcmask 1041408
      %v702 = vsel %vm700, %v304, 0
      %704 = vmatprep.subr.mxu0 0.0
      %705 = vmatpush1.msra.mxu0 %v303
      %706 = vmatprep.subr.mxu0 0.0
      %707 = vmatpush1.msra.mxu0 %v702
      %708 = vmatprep.subr.mxu0 0.0
      %709 = vmatpush1.msra.mxu0 0.0
      %710 = vmatprep.subr.mxu0 0.0
      %711 = vmatpush1.msra.mxu0 0.0
      %712 = vmatprep.subr.mxu0 0.0
      %713 = vmatpush1.msra.mxu0 0.0
      %714 = vmatprep.subr.mxu0 0.0
      %715 = vmatpush1.msra.mxu0 0.0
      %716 = vmatprep.subr.mxu0 0.0
      %717 = vmatpush1.msra.mxu0 0.0
      %718 = vmatprep.subr.mxu0 0.0
      %719 = vmatpush1.msra.mxu0 0.0
      %720 = vmatprep.subr.mxu0 0.0
      %721 = vmatpush1.msra.mxu0 0.0
      %722 = vmatprep.subr.mxu0 0.0
      %723 = vmatpush1.msra.mxu0 0.0
      %724 = vmatprep.subr.mxu0 0.0
      %725 = vmatpush1.msra.mxu0 0.0
      %726 = vmatprep.subr.mxu0 0.0
      %727 = vmatpush1.msra.mxu0 0.0
      %728 = vmatprep.subr.mxu0 0.0
      %729 = vmatpush1.msra.mxu0 0.0
      %730 = vmatprep.subr.mxu0 0.0
      %731 = vmatpush1.msra.mxu0 0.0
      %732 = vmatprep.subr.mxu0 0.0
      %733 = vmatpush1.msra.mxu0 0.0
      %734 = vmatprep.subr.mxu0 0.0
      %735 = vmatpush1.msra.mxu0 0.0
      %736 = vmatprep.subr.mxu0 0.0
      %737 = vmatpush1.msra.mxu0 0.0
      %738 = vmatprep.subr.mxu0 0.0
      %739 = vmatpush1.msra.mxu0 0.0
      %740 = vmatprep.subr.mxu0 0.0
      %741 = vmatpush1.msra.mxu0 0.0
      %742 = vmatprep.subr.mxu0 0.0
      %743 = vmatpush1.msra.mxu0 0.0
      %744 = vmatprep.subr.mxu0 0.0
      %745 = vmatpush1.msra.mxu0 0.0
      %746 = vmatprep.subr.mxu0 0.0
      %747 = vmatpush1.msra.mxu0 0.0
      %748 = vmatprep.subr.mxu0 0.0
      %749 = vmatpush1.msra.mxu0 0.0
      %750 = vmatprep.subr.mxu0 0.0
      %751 = vmatpush1.msra.mxu0 0.0
      %752 = vmatprep.subr.mxu0 0.0
      %753 = vmatpush1.msra.mxu0 0.0
      %754 = vmatprep.subr.mxu0 0.0
      %755 = vmatpush1.msra.mxu0 0.0
      %756 = vmatprep.subr.mxu0 0.0
      %757 = vmatpush1.msra.mxu0 0.0
      %758 = vmatprep.subr.mxu0 0.0
      %759 = vmatpush1.msra.mxu0 0.0
      %760 = vmatprep.subr.mxu0 0.0
      %761 = vmatpush1.msra.mxu0 0.0
      %762 = vmatprep.subr.mxu0 0.0
      %763 = vmatpush1.msra.mxu0 0.0
      %764 = vmatprep.subr.mxu0 0.0
      %765 = vmatpush1.msra.mxu0 0.0
      %766 = vmatprep.subr.mxu0 0.0
      %767 = vmatpush1.msra.mxu0 0.0
      %768 = vmatprep.mubr.f32.mxu0 0.0
      %769 = vmatmul.mubr.f32.gmra.mrb[0].mxu0 %v314
      %v770 = vpop.f32.mrb[0].mxu0
      %v771 = vadd.f32 %v310, %v770
      %v772 = vpop.f32.mrb[0].mxu0
      %773 = vmatprep.mubr.f32.mxu0 0.0
      %774 = vmatmul.mubr.f32.gmra.mrb[0].mxu0 %v317
      %v775 = vpop.f32.mrb[0].mxu0
      %v776 = vadd.f32 %v310, %v775
      %v777 = vpop.f32.mrb[0].mxu0
      %778 = vmatprep.mubr.f32.mxu0 0.0
      %779 = vmatmul.mubr.f32.gmra.mrb[0].mxu0 %v320
      %v780 = vpop.f32.mrb[0].mxu0
      %v781 = vadd.f32 %v310, %v780
      %v782 = vpop.f32.mrb[0].mxu0
      %783 = vmatprep.mubr.f32.mxu0 0.0
      %784 = vmatmul.mubr.f32.gmra.mrb[0].mxu0 %v323
      %v785 = vpop.f32.mrb[0].mxu0
      %v786 = vadd.f32 %v310, %v785
      %v787 = vpop.f32.mrb[0].mxu0
      %788 = vmatprep.mubr.f32.mxu0 0.0
      %789 = vmatmul.mubr.f32.gmra.mrb[0].mxu0 %v326
      %v790 = vpop.f32.mrb[0].mxu0
      %v791 = vadd.f32 %v310, %v790
      %v792 = vpop.f32.mrb[0].mxu0
      %793 = vmatprep.mubr.f32.mxu0 0.0
      %794 = vmatmul.mubr.f32.gmra.mrb[0].mxu0 %v329
      %v795 = vpop.f32.mrb[0].mxu0
      %v796 = vadd.f32 %v310, %v795
      %v797 = vpop.f32.mrb[0].mxu0
      %798 = vmatprep.mubr.f32.mxu0 0.0
      %799 = vmatmul.mubr.f32.gmra.mrb[0].mxu0 %v332
      %v800 = vpop.f32.mrb[0].mxu0
      %v801 = vadd.f32 %v310, %v800
      %v802 = vpop.f32.mrb[0].mxu0
      %803 = vmatprep.mubr.f32.mxu0 0.0
      %804 = vmatmul.mubr.f32.gmra.mrb[0].mxu0 %v335
      %v805 = vpop.f32.mrb[0].mxu0
      %v806 = vadd.f32 %v310, %v805
      %v807 = vpop.f32.mrb[0].mxu0
      %808 = vmatprep.mubr.f32.mxu0 0.0
      %809 = vmatmul.mubr.f32.gmra.mrb[0].mxu0 %v338
      %v810 = vpop.f32.mrb[0].mxu0
      %v811 = vadd.f32 %v310, %v810
      %v812 = vpop.f32.mrb[0].mxu0
      %813 = vmatprep.mubr.f32.mxu0 0.0
      %814 = vmatmul.mubr.f32.gmra.mrb[0].mxu0 %v341
      %v815 = vpop.f32.mrb[0].mxu0
      %v816 = vadd.f32 %v310, %v815
      %v817 = vpop.f32.mrb[0].mxu0
      %818 = vmatprep.mubr.f32.mxu0 0.0
      %819 = vmatmul.mubr.f32.gmra.mrb[0].mxu0 %v344
      %v820 = vpop.f32.mrb[0].mxu0
      %v821 = vadd.f32 %v310, %v820
      %v822 = vpop.f32.mrb[0].mxu0
      %823 = vmatprep.mubr.f32.mxu0 0.0
      %824 = vmatmul.mubr.f32.gmra.mrb[0].mxu0 %v347
      %v825 = vpop.f32.mrb[0].mxu0
      %v826 = vadd.f32 %v310, %v825
      %v827 = vpop.f32.mrb[0].mxu0
      %828 = vmatprep.mubr.f32.mxu0 0.0
      %829 = vmatmul.mubr.f32.gmra.mrb[0].mxu0 %v350
      %v830 = vpop.f32.mrb[0].mxu0
      %v831 = vadd.f32 %v310, %v830
      %v832 = vpop.f32.mrb[0].mxu0
      %833 = vmatprep.mubr.f32.mxu0 0.0
      %834 = vmatmul.mubr.f32.gmra.mrb[0].mxu0 %v353
      %v835 = vpop.f32.mrb[0].mxu0
      %v836 = vadd.f32 %v310, %v835
      %v837 = vpop.f32.mrb[0].mxu0
      %838 = vmatprep.mubr.f32.mxu0 0.0
      %839 = vmatmul.mubr.f32.gmra.mrb[0].mxu0 %v356
      %v840 = vpop.f32.mrb[0].mxu0
      %v841 = vadd.f32 %v310, %v840
      %v842 = vpop.f32.mrb[0].mxu0
      %843 = vmatprep.mubr.f32.mxu0 0.0
      %844 = vmatmul.mubr.f32.gmra.mrb[0].mxu0 %v359
      %v845 = vpop.f32.mrb[0].mxu0
      %v846 = vadd.f32 %v310, %v845
      %v847 = vpop.f32.mrb[0].mxu0
      %848 = vmatprep.mubr.f32.mxu0 0.0
      %849 = vmatmul.mubr.f32.gmra.mrb[0].mxu0 %v362
      %v850 = vpop.f32.mrb[0].mxu0
      %v851 = vadd.f32 %v310, %v850
      %v852 = vpop.f32.mrb[0].mxu0
      %853 = vmatprep.mubr.f32.mxu0 0.0
      %854 = vmatmul.mubr.f32.gmra.mrb[0].mxu0 %v365
      %v855 = vpop.f32.mrb[0].mxu0
      %v856 = vadd.f32 %v310, %v855
      %v857 = vpop.f32.mrb[0].mxu0
      %858 = vmatprep.mubr.f32.mxu0 0.0
      %859 = vmatmul.mubr.f32.gmra.mrb[0].mxu0 %v368
      %v860 = vpop.f32.mrb[0].mxu0
      %v861 = vadd.f32 %v310, %v860
      %v862 = vpop.f32.mrb[0].mxu0
      %863 = vmatprep.mubr.f32.mxu0 0.0
      %864 = vmatmul.mubr.f32.gmra.mrb[0].mxu0 %v371
      %v865 = vpop.f32.mrb[0].mxu0
      %v866 = vadd.f32 %v310, %v865
      %v867 = vpop.f32.mrb[0].mxu0
      %868 = vmatprep.mubr.f32.mxu0 0.0
      %869 = vmatmul.mubr.f32.gmra.mrb[0].mxu0 %v374
      %v870 = vpop.f32.mrb[0].mxu0
      %v871 = vadd.f32 %v310, %v870
      %v872 = vpop.f32.mrb[0].mxu0
      %873 = vmatprep.mubr.f32.mxu0 0.0
      %874 = vmatmul.mubr.f32.gmra.mrb[0].mxu0 %v377
      %v875 = vpop.f32.mrb[0].mxu0
      %v876 = vadd.f32 %v310, %v875
      %v877 = vpop.f32.mrb[0].mxu0
      %878 = vmatprep.mubr.f32.mxu0 0.0
      %879 = vmatmul.mubr.f32.gmra.mrb[0].mxu0 %v380
      %v880 = vpop.f32.mrb[0].mxu0
      %v881 = vadd.f32 %v310, %v880
      %v882 = vpop.f32.mrb[0].mxu0
      %883 = vmatprep.mubr.f32.mxu0 0.0
      %884 = vmatmul.mubr.f32.gmra.mrb[0].mxu0 %v383
      %v885 = vpop.f32.mrb[0].mxu0
      %v886 = vadd.f32 %v310, %v885
      %v887 = vpop.f32.mrb[0].mxu0
      %888 = vmatprep.mubr.f32.mxu0 0.0
      %889 = vmatmul.mubr.f32.gmra.mrb[0].mxu0 %v386
      %v890 = vpop.f32.mrb[0].mxu0
      %v891 = vadd.f32 %v310, %v890
      %v892 = vpop.f32.mrb[0].mxu0
      %893 = vmatprep.mubr.f32.mxu0 0.0
      %894 = vmatmul.mubr.f32.gmra.mrb[0].mxu0 %v389
      %v895 = vpop.f32.mrb[0].mxu0
      %v896 = vadd.f32 %v310, %v895
      %v897 = vpop.f32.mrb[0].mxu0
      %898 = vmatprep.mubr.f32.mxu0 0.0
      %899 = vmatmul.mubr.f32.gmra.mrb[0].mxu0 %v392
      %v900 = vpop.f32.mrb[0].mxu0
      %v901 = vadd.f32 %v310, %v900
      %v902 = vpop.f32.mrb[0].mxu0
      %903 = vmatprep.mubr.f32.mxu0 0.0
      %904 = vmatmul.mubr.f32.gmra.mrb[0].mxu0 %v395
      %v905 = vpop.f32.mrb[0].mxu0
      %v906 = vadd.f32 %v310, %v905
      %v907 = vpop.f32.mrb[0].mxu0
      %908 = vmatprep.mubr.f32.mxu0 0.0
      %909 = vmatmul.mubr.f32.gmra.mrb[0].mxu0 %v398
      %v910 = vpop.f32.mrb[0].mxu0
      %v911 = vadd.f32 %v310, %v910
      %v912 = vpop.f32.mrb[0].mxu0
      %913 = vmatprep.mubr.f32.mxu0 0.0
      %914 = vmatmul.mubr.f32.gmra.mrb[0].mxu0 %v401
      %v915 = vpop.f32.mrb[0].mxu0
      %v916 = vadd.f32 %v310, %v915
      %v917 = vpop.f32.mrb[0].mxu0
      %918 = vmatprep.mubr.f32.mxu0 0.0
      %919 = vmatmul.mubr.f32.gmra.mrb[0].mxu0 %v404
      %v920 = vpop.f32.mrb[0].mxu0
      %v921 = vadd.f32 %v310, %v920
      %v922 = vpop.f32.mrb[0].mxu0
      %923 = vmatprep.mubr.f32.mxu0 0.0
      %924 = vmatmul.mubr.f32.gmra.mrb[0].mxu0 %v407
      %v925 = vpop.f32.mrb[0].mxu0
      %v926 = vadd.f32 %v310, %v925
      %v927 = vpop.f32.mrb[0].mxu0
      %928 = vmatprep.mubr.f32.mxu0 0.0
      %929 = vmatmul.mubr.f32.gmra.mrb[0].mxu0 %v410
      %v930 = vpop.f32.mrb[0].mxu0
      %v931 = vadd.f32 %v310, %v930
      %v932 = vpop.f32.mrb[0].mxu0
      %933 = vmatprep.mubr.f32.mxu0 0.0
      %934 = vmatmul.mubr.f32.gmra.mrb[0].mxu0 %v413
      %v935 = vpop.f32.mrb[0].mxu0
      %v936 = vadd.f32 %v310, %v935
      %v937 = vpop.f32.mrb[0].mxu0
      %938 = vmatprep.mubr.f32.mxu0 0.0
      %939 = vmatmul.mubr.f32.gmra.mrb[0].mxu0 %v416
      %v940 = vpop.f32.mrb[0].mxu0
      %v941 = vadd.f32 %v310, %v940
      %v942 = vpop.f32.mrb[0].mxu0
      %943 = vmatprep.mubr.f32.mxu0 0.0
      %944 = vmatmul.mubr.f32.gmra.mrb[0].mxu0 %v419
      %v945 = vpop.f32.mrb[0].mxu0
      %v946 = vadd.f32 %v310, %v945
      %v947 = vpop.f32.mrb[0].mxu0
      %948 = vmatprep.mubr.f32.mxu0 0.0
      %949 = vmatmul.mubr.f32.gmra.mrb[0].mxu0 %v422
      %v950 = vpop.f32.mrb[0].mxu0
      %v951 = vadd.f32 %v310, %v950
      %v952 = vpop.f32.mrb[0].mxu0
      %953 = vmatprep.mubr.f32.mxu0 0.0
      %954 = vmatmul.mubr.f32.gmra.mrb[0].mxu0 %v425
      %v955 = vpop.f32.mrb[0].mxu0
      %v956 = vadd.f32 %v310, %v955
      %v957 = vpop.f32.mrb[0].mxu0
      %958 = vmatprep.mubr.f32.mxu0 0.0
      %959 = vmatmul.mubr.f32.gmra.mrb[0].mxu0 %v428
      %v960 = vpop.f32.mrb[0].mxu0
      %v961 = vadd.f32 %v310, %v960
      %v962 = vpop.f32.mrb[0].mxu0
      %963 = vmatprep.mubr.f32.mxu0 0.0
      %964 = vmatmul.mubr.f32.gmra.mrb[0].mxu0 %v431
      %v965 = vpop.f32.mrb[0].mxu0
      %v966 = vadd.f32 %v310, %v965
      %v967 = vpop.f32.mrb[0].mxu0
      %968 = vmatprep.mubr.f32.mxu0 0.0
      %969 = vmatmul.mubr.f32.gmra.mrb[0].mxu0 %v434
      %v970 = vpop.f32.mrb[0].mxu0
      %v971 = vadd.f32 %v310, %v970
      %v972 = vpop.f32.mrb[0].mxu0
      %973 = vmatprep.mubr.f32.mxu0 0.0
      %974 = vmatmul.mubr.f32.gmra.mrb[0].mxu0 %v437
      %v975 = vpop.f32.mrb[0].mxu0
      %v976 = vadd.f32 %v310, %v975
      %v977 = vpop.f32.mrb[0].mxu0
      %978 = vmatprep.mubr.f32.mxu0 0.0
      %979 = vmatmul.mubr.f32.gmra.mrb[0].mxu0 %v440
      %v980 = vpop.f32.mrb[0].mxu0
      %v981 = vadd.f32 %v310, %v980
      %v982 = vpop.f32.mrb[0].mxu0
      %983 = vmatprep.mubr.f32.mxu0 0.0
      %984 = vmatmul.mubr.f32.gmra.mrb[0].mxu0 %v443
      %v985 = vpop.f32.mrb[0].mxu0
      %v986 = vadd.f32 %v310, %v985
      %v987 = vpop.f32.mrb[0].mxu0
      %988 = vmatprep.mubr.f32.mxu0 0.0
      %989 = vmatmul.mubr.f32.gmra.mrb[0].mxu0 %v446
      %v990 = vpop.f32.mrb[0].mxu0
      %v991 = vadd.f32 %v310, %v990
      %v992 = vpop.f32.mrb[0].mxu0
      %993 = vmatprep.mubr.f32.mxu0 0.0
      %994 = vmatmul.mubr.f32.gmra.mrb[0].mxu0 %v449
      %v995 = vpop.f32.mrb[0].mxu0
      %v996 = vadd.f32 %v310, %v995
      %v997 = vpop.f32.mrb[0].mxu0
      %998 = vmatprep.mubr.f32.mxu0 0.0
      %999 = vmatmul.mubr.f32.gmra.mrb[0].mxu0 %v452
      %v1000 = vpop.f32.mrb[0].mxu0
      %v1001 = vadd.f32 %v310, %v1000
      %v1002 = vpop.f32.mrb[0].mxu0
      %1003 = vmatprep.mubr.f32.mxu0 0.0
      %1004 = vmatmul.mubr.f32.gmra.mrb[0].mxu0 %v455
      %v1005 = vpop.f32.mrb[0].mxu0
      %v1006 = vadd.f32 %v310, %v1005
      %v1007 = vpop.f32.mrb[0].mxu0
      %1008 = vmatprep.mubr.f32.mxu0 0.0
      %1009 = vmatmul.mubr.f32.gmra.mrb[0].mxu0 %v458
      %v1010 = vpop.f32.mrb[0].mxu0
      %v1011 = vadd.f32 %v310, %v1010
      %v1012 = vpop.f32.mrb[0].mxu0
      %1013 = vmatprep.mubr.f32.mxu0 0.0
      %1014 = vmatmul.mubr.f32.gmra.mrb[0].mxu0 %v461
      %v1015 = vpop.f32.mrb[0].mxu0
      %v1016 = vadd.f32 %v310, %v1015
      %v1017 = vpop.f32.mrb[0].mxu0
      %1018 = vmatprep.mubr.f32.mxu0 0.0
      %1019 = vmatmul.mubr.f32.gmra.mrb[0].mxu0 %v464
      %v1020 = vpop.f32.mrb[0].mxu0
      %v1021 = vadd.f32 %v310, %v1020
      %v1022 = vpop.f32.mrb[0].mxu0
      %1023 = vmatprep.mubr.f32.mxu0 0.0
      %1024 = vmatmul.mubr.f32.gmra.mrb[0].mxu0 %v467
      %v1025 = vpop.f32.mrb[0].mxu0
      %v1026 = vadd.f32 %v310, %v1025
      %v1027 = vpop.f32.mrb[0].mxu0
      %1028 = vmatprep.mubr.f32.mxu0 0.0
      %1029 = vmatmul.mubr.f32.gmra.mrb[0].mxu0 %v470
      %v1030 = vpop.f32.mrb[0].mxu0
      %v1031 = vadd.f32 %v310, %v1030
      %v1032 = vpop.f32.mrb[0].mxu0
      %1033 = vmatprep.mubr.f32.mxu0 0.0
      %1034 = vmatmul.mubr.f32.gmra.mrb[0].mxu0 %v473
      %v1035 = vpop.f32.mrb[0].mxu0
      %v1036 = vadd.f32 %v310, %v1035
      %v1037 = vpop.f32.mrb[0].mxu0
      %1038 = vmatprep.mubr.f32.mxu0 0.0
      %1039 = vmatmul.mubr.f32.gmra.mrb[0].mxu0 %v476
      %v1040 = vpop.f32.mrb[0].mxu0
      %v1041 = vadd.f32 %v310, %v1040
      %v1042 = vpop.f32.mrb[0].mxu0
      %1043 = vmatprep.mubr.f32.mxu0 0.0
      %1044 = vmatmul.mubr.f32.gmra.mrb[0].mxu0 %v479
      %v1045 = vpop.f32.mrb[0].mxu0
      %v1046 = vadd.f32 %v310, %v1045
      %v1047 = vpop.f32.mrb[0].mxu0
      %1048 = vmatprep.mubr.f32.mxu0 0.0
      %1049 = vmatmul.mubr.f32.gmra.mrb[0].mxu0 %v482
      %v1050 = vpop.f32.mrb[0].mxu0
      %v1051 = vadd.f32 %v310, %v1050
      %v1052 = vpop.f32.mrb[0].mxu0
      %1053 = vmatprep.mubr.f32.mxu0 0.0
      %1054 = vmatmul.mubr.f32.gmra.mrb[0].mxu0 %v485
      %v1055 = vpop.f32.mrb[0].mxu0
      %v1056 = vadd.f32 %v310, %v1055
      %v1057 = vpop.f32.mrb[0].mxu0
      %1058 = vmatprep.mubr.f32.mxu0 0.0
      %1059 = vmatmul.mubr.f32.gmra.mrb[0].mxu0 %v488
      %v1060 = vpop.f32.mrb[0].mxu0
      %v1061 = vadd.f32 %v310, %v1060
      %v1062 = vpop.f32.mrb[0].mxu0
      %1063 = vmatprep.mubr.f32.mxu0 0.0
      %1064 = vmatmul.mubr.f32.gmra.mrb[0].mxu0 %v491
      %v1065 = vpop.f32.mrb[0].mxu0
      %v1066 = vadd.f32 %v310, %v1065
      %v1067 = vpop.f32.mrb[0].mxu0
      %1068 = vmatprep.mubr.f32.mxu0 0.0
      %1069 = vmatmul.mubr.f32.gmra.mrb[0].mxu0 %v494
      %v1070 = vpop.f32.mrb[0].mxu0
      %v1071 = vadd.f32 %v310, %v1070
      %v1072 = vpop.f32.mrb[0].mxu0
      %1073 = vmatprep.mubr.f32.mxu0 0.0
      %1074 = vmatmul.mubr.f32.gmra.mrb[0].mxu0 %v497
      %v1075 = vpop.f32.mrb[0].mxu0
      %v1076 = vadd.f32 %v310, %v1075
      %v1077 = vpop.f32.mrb[0].mxu0
      %1078 = vmatprep.mubr.f32.mxu0 0.0
      %1079 = vmatmul.mubr.f32.gmra.mrb[0].mxu0 %v500
      %v1080 = vpop.f32.mrb[0].mxu0
      %v1081 = vadd.f32 %v310, %v1080
      %v1082 = vpop.f32.mrb[0].mxu0
      %1083 = vmatprep.mubr.f32.mxu0 0.0
      %1084 = vmatmul.mubr.f32.gmra.mrb[0].mxu0 %v503
      %v1085 = vpop.f32.mrb[0].mxu0
      %v1086 = vadd.f32 %v310, %v1085
      %v1087 = vpop.f32.mrb[0].mxu0
      %1088 = vmatprep.mubr.f32.mxu0 0.0
      %1089 = vmatmul.mubr.f32.gmra.mrb[0].mxu0 %v506
      %v1090 = vpop.f32.mrb[0].mxu0
      %v1091 = vadd.f32 %v310, %v1090
      %v1092 = vpop.f32.mrb[0].mxu0
      %1093 = vmatprep.mubr.f32.mxu0 0.0
      %1094 = vmatmul.mubr.f32.gmra.mrb[0].mxu0 %v509
      %v1095 = vpop.f32.mrb[0].mxu0
      %v1096 = vadd.f32 %v310, %v1095
      %v1097 = vpop.f32.mrb[0].mxu0
      %1098 = vmatprep.mubr.f32.mxu0 0.0
      %1099 = vmatmul.mubr.f32.gmra.mrb[0].mxu0 %v512
      %v1100 = vpop.f32.mrb[0].mxu0
      %v1101 = vadd.f32 %v310, %v1100
      %v1102 = vpop.f32.mrb[0].mxu0
      %1103 = vmatprep.mubr.f32.mxu0 0.0
      %1104 = vmatmul.mubr.f32.gmra.mrb[0].mxu0 %v515
      %v1105 = vpop.f32.mrb[0].mxu0
      %v1106 = vadd.f32 %v310, %v1105
      %v1107 = vpop.f32.mrb[0].mxu0
      %1108 = vmatprep.mubr.f32.mxu0 0.0
      %1109 = vmatmul.mubr.f32.gmra.mrb[0].mxu0 %v518
      %v1110 = vpop.f32.mrb[0].mxu0
      %v1111 = vadd.f32 %v310, %v1110
      %v1112 = vpop.f32.mrb[0].mxu0
      %1113 = vmatprep.mubr.f32.mxu0 0.0
      %1114 = vmatmul.mubr.f32.gmra.mrb[0].mxu0 %v521
      %v1115 = vpop.f32.mrb[0].mxu0
      %v1116 = vadd.f32 %v310, %v1115
      %v1117 = vpop.f32.mrb[0].mxu0
      %1118 = vmatprep.mubr.f32.mxu0 0.0
      %1119 = vmatmul.mubr.f32.gmra.mrb[0].mxu0 %v524
      %v1120 = vpop.f32.mrb[0].mxu0
      %v1121 = vadd.f32 %v310, %v1120
      %v1122 = vpop.f32.mrb[0].mxu0
      %1123 = vmatprep.mubr.f32.mxu0 0.0
      %1124 = vmatmul.mubr.f32.gmra.mrb[0].mxu0 %v527
      %v1125 = vpop.f32.mrb[0].mxu0
      %v1126 = vadd.f32 %v310, %v1125
      %v1127 = vpop.f32.mrb[0].mxu0
      %1128 = vmatprep.mubr.f32.mxu0 0.0
      %1129 = vmatmul.mubr.f32.gmra.mrb[0].mxu0 %v530
      %v1130 = vpop.f32.mrb[0].mxu0
      %v1131 = vadd.f32 %v310, %v1130
      %v1132 = vpop.f32.mrb[0].mxu0
      %1133 = vmatprep.mubr.f32.mxu0 0.0
      %1134 = vmatmul.mubr.f32.gmra.mrb[0].mxu0 %v533
      %v1135 = vpop.f32.mrb[0].mxu0
      %v1136 = vadd.f32 %v310, %v1135
      %v1137 = vpop.f32.mrb[0].mxu0
      %1138 = vmatprep.mubr.f32.mxu0 0.0
      %1139 = vmatmul.mubr.f32.gmra.mrb[0].mxu0 %v536
      %v1140 = vpop.f32.mrb[0].mxu0
      %v1141 = vadd.f32 %v310, %v1140
      %v1142 = vpop.f32.mrb[0].mxu0
      %1143 = vmatprep.mubr.f32.mxu0 0.0
      %1144 = vmatmul.mubr.f32.gmra.mrb[0].mxu0 %v539
      %v1145 = vpop.f32.mrb[0].mxu0
      %v1146 = vadd.f32 %v310, %v1145
      %v1147 = vpop.f32.mrb[0].mxu0
      %1148 = vmatprep.mubr.f32.mxu0 0.0
      %1149 = vmatmul.mubr.f32.gmra.mrb[0].mxu0 %v542
      %v1150 = vpop.f32.mrb[0].mxu0
      %v1151 = vadd.f32 %v310, %v1150
      %v1152 = vpop.f32.mrb[0].mxu0
      %1153 = vmatprep.mubr.f32.mxu0 0.0
      %1154 = vmatmul.mubr.f32.gmra.mrb[0].mxu0 %v545
      %v1155 = vpop.f32.mrb[0].mxu0
      %v1156 = vadd.f32 %v310, %v1155
      %v1157 = vpop.f32.mrb[0].mxu0
      %1158 = vmatprep.mubr.f32.mxu0 0.0
      %1159 = vmatmul.mubr.f32.gmra.mrb[0].mxu0 %v548
      %v1160 = vpop.f32.mrb[0].mxu0
      %v1161 = vadd.f32 %v310, %v1160
      %v1162 = vpop.f32.mrb[0].mxu0
      %1163 = vmatprep.mubr.f32.mxu0 0.0
      %1164 = vmatmul.mubr.f32.gmra.mrb[0].mxu0 %v551
      %v1165 = vpop.f32.mrb[0].mxu0
      %v1166 = vadd.f32 %v310, %v1165
      %v1167 = vpop.f32.mrb[0].mxu0
      %1168 = vmatprep.mubr.f32.mxu0 0.0
      %1169 = vmatmul.mubr.f32.gmra.mrb[0].mxu0 %v554
      %v1170 = vpop.f32.mrb[0].mxu0
      %v1171 = vadd.f32 %v310, %v1170
      %v1172 = vpop.f32.mrb[0].mxu0
      %1173 = vmatprep.mubr.f32.mxu0 0.0
      %1174 = vmatmul.mubr.f32.gmra.mrb[0].mxu0 %v557
      %v1175 = vpop.f32.mrb[0].mxu0
      %v1176 = vadd.f32 %v310, %v1175
      %v1177 = vpop.f32.mrb[0].mxu0
      %1178 = vmatprep.mubr.f32.mxu0 0.0
      %1179 = vmatmul.mubr.f32.gmra.mrb[0].mxu0 %v560
      %v1180 = vpop.f32.mrb[0].mxu0
      %v1181 = vadd.f32 %v310, %v1180
      %v1182 = vpop.f32.mrb[0].mxu0
      %1183 = vmatprep.mubr.f32.mxu0 0.0
      %1184 = vmatmul.mubr.f32.gmra.mrb[0].mxu0 %v563
      %v1185 = vpop.f32.mrb[0].mxu0
      %v1186 = vadd.f32 %v310, %v1185
      %v1187 = vpop.f32.mrb[0].mxu0
      %1188 = vmatprep.mubr.f32.mxu0 0.0
      %1189 = vmatmul.mubr.f32.gmra.mrb[0].mxu0 %v566
      %v1190 = vpop.f32.mrb[0].mxu0
      %v1191 = vadd.f32 %v310, %v1190
      %v1192 = vpop.f32.mrb[0].mxu0
      %1193 = vmatprep.mubr.f32.mxu0 0.0
      %1194 = vmatmul.mubr.f32.gmra.mrb[0].mxu0 %v569
      %v1195 = vpop.f32.mrb[0].mxu0
      %v1196 = vadd.f32 %v310, %v1195
      %v1197 = vpop.f32.mrb[0].mxu0
      %1198 = vmatprep.mubr.f32.mxu0 0.0
      %1199 = vmatmul.mubr.f32.gmra.mrb[0].mxu0 %v572
      %v1200 = vpop.f32.mrb[0].mxu0
      %v1201 = vadd.f32 %v310, %v1200
      %v1202 = vpop.f32.mrb[0].mxu0
      %1203 = vmatprep.mubr.f32.mxu0 0.0
      %1204 = vmatmul.mubr.f32.gmra.mrb[0].mxu0 %v575
      %v1205 = vpop.f32.mrb[0].mxu0
      %v1206 = vadd.f32 %v310, %v1205
      %v1207 = vpop.f32.mrb[0].mxu0
      %1208 = vmatprep.mubr.f32.mxu0 0.0
      %1209 = vmatmul.mubr.f32.gmra.mrb[0].mxu0 %v578
      %v1210 = vpop.f32.mrb[0].mxu0
      %v1211 = vadd.f32 %v310, %v1210
      %v1212 = vpop.f32.mrb[0].mxu0
      %1213 = vmatprep.mubr.f32.mxu0 0.0
      %1214 = vmatmul.mubr.f32.gmra.mrb[0].mxu0 %v581
      %v1215 = vpop.f32.mrb[0].mxu0
      %v1216 = vadd.f32 %v310, %v1215
      %v1217 = vpop.f32.mrb[0].mxu0
      %1218 = vmatprep.mubr.f32.mxu0 0.0
      %1219 = vmatmul.mubr.f32.gmra.mrb[0].mxu0 %v584
      %v1220 = vpop.f32.mrb[0].mxu0
      %v1221 = vadd.f32 %v310, %v1220
      %v1222 = vpop.f32.mrb[0].mxu0
      %1223 = vmatprep.mubr.f32.mxu0 0.0
      %1224 = vmatmul.mubr.f32.gmra.mrb[0].mxu0 %v587
      %v1225 = vpop.f32.mrb[0].mxu0
      %v1226 = vadd.f32 %v310, %v1225
      %v1227 = vpop.f32.mrb[0].mxu0
      %1228 = vmatprep.mubr.f32.mxu0 0.0
      %1229 = vmatmul.mubr.f32.gmra.mrb[0].mxu0 %v590
      %v1230 = vpop.f32.mrb[0].mxu0
      %v1231 = vadd.f32 %v310, %v1230
      %v1232 = vpop.f32.mrb[0].mxu0
      %1233 = vmatprep.mubr.f32.mxu0 0.0
      %1234 = vmatmul.mubr.f32.gmra.mrb[0].mxu0 %v593
      %v1235 = vpop.f32.mrb[0].mxu0
      %v1236 = vadd.f32 %v310, %v1235
      %v1237 = vpop.f32.mrb[0].mxu0
      %1238 = vmatprep.mubr.f32.mxu0 0.0
      %1239 = vmatmul.mubr.f32.gmra.mrb[0].mxu0 %v596
      %v1240 = vpop.f32.mrb[0].mxu0
      %v1241 = vadd.f32 %v310, %v1240
      %v1242 = vpop.f32.mrb[0].mxu0
      %1243 = vmatprep.mubr.f32.mxu0 0.0
      %1244 = vmatmul.mubr.f32.gmra.mrb[0].mxu0 %v599
      %v1245 = vpop.f32.mrb[0].mxu0
      %v1246 = vadd.f32 %v310, %v1245
      %v1247 = vpop.f32.mrb[0].mxu0
      %1248 = vmatprep.mubr.f32.mxu0 0.0
      %1249 = vmatmul.mubr.f32.gmra.mrb[0].mxu0 %v602
      %v1250 = vpop.f32.mrb[0].mxu0
      %v1251 = vadd.f32 %v310, %v1250
      %v1252 = vpop.f32.mrb[0].mxu0
      %1253 = vmatprep.mubr.f32.mxu0 0.0
      %1254 = vmatmul.mubr.f32.gmra.mrb[0].mxu0 %v605
      %v1255 = vpop.f32.mrb[0].mxu0
      %v1256 = vadd.f32 %v310, %v1255
      %v1257 = vpop.f32.mrb[0].mxu0
      %1258 = vmatprep.mubr.f32.mxu0 0.0
      %1259 = vmatmul.mubr.f32.gmra.mrb[0].mxu0 %v608
      %v1260 = vpop.f32.mrb[0].mxu0
      %v1261 = vadd.f32 %v310, %v1260
      %v1262 = vpop.f32.mrb[0].mxu0
      %1263 = vmatprep.mubr.f32.mxu0 0.0
      %1264 = vmatmul.mubr.f32.gmra.mrb[0].mxu0 %v611
      %v1265 = vpop.f32.mrb[0].mxu0
      %v1266 = vadd.f32 %v310, %v1265
      %v1267 = vpop.f32.mrb[0].mxu0
      %1268 = vmatprep.mubr.f32.mxu0 0.0
      %1269 = vmatmul.mubr.f32.gmra.mrb[0].mxu0 %v614
      %v1270 = vpop.f32.mrb[0].mxu0
      %v1271 = vadd.f32 %v310, %v1270
      %v1272 = vpop.f32.mrb[0].mxu0
      %1273 = vmatprep.mubr.f32.mxu0 0.0
      %1274 = vmatmul.mubr.f32.gmra.mrb[0].mxu0 %v617
      %v1275 = vpop.f32.mrb[0].mxu0
      %v1276 = vadd.f32 %v310, %v1275
      %v1277 = vpop.f32.mrb[0].mxu0
      %1278 = vmatprep.mubr.f32.mxu0 0.0
      %1279 = vmatmul.mubr.f32.gmra.mrb[0].mxu0 %v620
      %v1280 = vpop.f32.mrb[0].mxu0
      %v1281 = vadd.f32 %v310, %v1280
      %v1282 = vpop.f32.mrb[0].mxu0
      %1283 = vmatprep.mubr.f32.mxu0 0.0
      %1284 = vmatmul.mubr.f32.gmra.mrb[0].mxu0 %v623
      %v1285 = vpop.f32.mrb[0].mxu0
      %v1286 = vadd.f32 %v310, %v1285
      %v1287 = vpop.f32.mrb[0].mxu0
      %1288 = vmatprep.mubr.f32.mxu0 0.0
      %1289 = vmatmul.mubr.f32.gmra.mrb[0].mxu0 %v626
      %v1290 = vpop.f32.mrb[0].mxu0
      %v1291 = vadd.f32 %v310, %v1290
      %v1292 = vpop.f32.mrb[0].mxu0
      %1293 = vmatprep.mubr.f32.mxu0 0.0
      %1294 = vmatmul.mubr.f32.gmra.mrb[0].mxu0 %v629
      %v1295 = vpop.f32.mrb[0].mxu0
      %v1296 = vadd.f32 %v310, %v1295
      %v1297 = vpop.f32.mrb[0].mxu0
      %1298 = vmatprep.mubr.f32.mxu0 0.0
      %1299 = vmatmul.mubr.f32.gmra.mrb[0].mxu0 %v632
      %v1300 = vpop.f32.mrb[0].mxu0
      %v1301 = vadd.f32 %v310, %v1300
      %v1302 = vpop.f32.mrb[0].mxu0
      %1303 = vmatprep.mubr.f32.mxu0 0.0
      %1304 = vmatmul.mubr.f32.gmra.mrb[0].mxu0 %v635
      %v1305 = vpop.f32.mrb[0].mxu0
      %v1306 = vadd.f32 %v310, %v1305
      %v1307 = vpop.f32.mrb[0].mxu0
      %1308 = vmatprep.mubr.f32.mxu0 0.0
      %1309 = vmatmul.mubr.f32.gmra.mrb[0].mxu0 %v638
      %v1310 = vpop.f32.mrb[0].mxu0
      %v1311 = vadd.f32 %v310, %v1310
      %v1312 = vpop.f32.mrb[0].mxu0
      %1313 = vmatprep.mubr.f32.mxu0 0.0
      %1314 = vmatmul.mubr.f32.gmra.mrb[0].mxu0 %v641
      %v1315 = vpop.f32.mrb[0].mxu0
      %v1316 = vadd.f32 %v310, %v1315
      %v1317 = vpop.f32.mrb[0].mxu0
      %1318 = vmatprep.mubr.f32.mxu0 0.0
      %1319 = vmatmul.mubr.f32.gmra.mrb[0].mxu0 %v644
      %v1320 = vpop.f32.mrb[0].mxu0
      %v1321 = vadd.f32 %v310, %v1320
      %v1322 = vpop.f32.mrb[0].mxu0
      %1323 = vmatprep.mubr.f32.mxu0 0.0
      %1324 = vmatmul.mubr.f32.gmra.mrb[0].mxu0 %v647
      %v1325 = vpop.f32.mrb[0].mxu0
      %v1326 = vadd.f32 %v310, %v1325
      %v1327 = vpop.f32.mrb[0].mxu0
      %1328 = vmatprep.mubr.f32.mxu0 0.0
      %1329 = vmatmul.mubr.f32.gmra.mrb[0].mxu0 %v650
      %v1330 = vpop.f32.mrb[0].mxu0
      %v1331 = vadd.f32 %v310, %v1330
      %v1332 = vpop.f32.mrb[0].mxu0
      %1333 = vmatprep.mubr.f32.mxu0 0.0
      %1334 = vmatmul.mubr.f32.gmra.mrb[0].mxu0 %v653
      %v1335 = vpop.f32.mrb[0].mxu0
      %v1336 = vadd.f32 %v310, %v1335
      %v1337 = vpop.f32.mrb[0].mxu0
      %1338 = vmatprep.mubr.f32.mxu0 0.0
      %1339 = vmatmul.mubr.f32.gmra.mrb[0].mxu0 %v656
      %v1340 = vpop.f32.mrb[0].mxu0
      %v1341 = vadd.f32 %v310, %v1340
      %v1342 = vpop.f32.mrb[0].mxu0
      %1343 = vmatprep.mubr.f32.mxu0 0.0
      %1344 = vmatmul.mubr.f32.gmra.mrb[0].mxu0 %v659
      %v1345 = vpop.f32.mrb[0].mxu0
      %v1346 = vadd.f32 %v310, %v1345
      %v1347 = vpop.f32.mrb[0].mxu0
      %1348 = vmatprep.mubr.f32.mxu0 0.0
      %1349 = vmatmul.mubr.f32.gmra.mrb[0].mxu0 %v662
      %v1350 = vpop.f32.mrb[0].mxu0
      %v1351 = vadd.f32 %v310, %v1350
      %v1352 = vpop.f32.mrb[0].mxu0
      %1353 = vmatprep.mubr.f32.mxu0 0.0
      %1354 = vmatmul.mubr.f32.gmra.mrb[0].mxu0 %v665
      %v1355 = vpop.f32.mrb[0].mxu0
      %v1356 = vadd.f32 %v310, %v1355
      %v1357 = vpop.f32.mrb[0].mxu0
      %1358 = vmatprep.mubr.f32.mxu0 0.0
      %1359 = vmatmul.mubr.f32.gmra.mrb[0].mxu0 %v668
      %v1360 = vpop.f32.mrb[0].mxu0
      %v1361 = vadd.f32 %v310, %v1360
      %v1362 = vpop.f32.mrb[0].mxu0
      %1363 = vmatprep.mubr.f32.mxu0 0.0
      %1364 = vmatmul.mubr.f32.gmra.mrb[0].mxu0 %v671
      %v1365 = vpop.f32.mrb[0].mxu0
      %v1366 = vadd.f32 %v310, %v1365
      %v1367 = vpop.f32.mrb[0].mxu0
      %1368 = vmatprep.mubr.f32.mxu0 0.0
      %1369 = vmatmul.mubr.f32.gmra.mrb[0].mxu0 %v674
      %v1370 = vpop.f32.mrb[0].mxu0
      %v1371 = vadd.f32 %v310, %v1370
      %v1372 = vpop.f32.mrb[0].mxu0
      %1373 = vmatprep.mubr.f32.mxu0 0.0
      %1374 = vmatmul.mubr.f32.gmra.mrb[0].mxu0 %v677
      %v1375 = vpop.f32.mrb[0].mxu0
      %v1376 = vadd.f32 %v310, %v1375
      %v1377 = vpop.f32.mrb[0].mxu0
      %1378 = vmatprep.mubr.f32.mxu0 0.0
      %1379 = vmatmul.mubr.f32.gmra.mrb[0].mxu0 %v680
      %v1380 = vpop.f32.mrb[0].mxu0
      %v1381 = vadd.f32 %v310, %v1380
      %v1382 = vpop.f32.mrb[0].mxu0
      %1383 = vmatprep.mubr.f32.mxu0 0.0
      %1384 = vmatmul.mubr.f32.gmra.mrb[0].mxu0 %v683
      %v1385 = vpop.f32.mrb[0].mxu0
      %v1386 = vadd.f32 %v310, %v1385
      %v1387 = vpop.f32.mrb[0].mxu0
      %1388 = vmatprep.mubr.f32.mxu0 0.0
      %1389 = vmatmul.mubr.f32.gmra.mrb[0].mxu0 %v686
      %v1390 = vpop.f32.mrb[0].mxu0
      %v1391 = vadd.f32 %v310, %v1390
      %v1392 = vpop.f32.mrb[0].mxu0
      %1393 = vmatprep.mubr.f32.mxu0 0.0
      %1394 = vmatmul.mubr.f32.gmra.mrb[0].mxu0 %v689
      %v1395 = vpop.f32.mrb[0].mxu0
      %v1396 = vadd.f32 %v310, %v1395
      %v1397 = vpop.f32.mrb[0].mxu0
      %1398 = vmatprep.mubr.f32.mxu0 0.0
      %1399 = vmatmul.mubr.f32.gmra.mrb[0].mxu0 %v692
      %v1400 = vpop.f32.mrb[0].mxu0
      %v1401 = vadd.f32 %v310, %v1400
      %v1402 = vpop.f32.mrb[0].mxu0
      %1403 = vmatprep.mubr.f32.mxu0 0.0
      %1404 = vmatmul.mubr.f32.gmra.mrb[0].mxu0 %v695
      %v1405 = vpop.f32.mrb[0].mxu0
      %v1406 = vadd.f32 %v310, %v1405
      %v1407 = vpop.f32.mrb[0].mxu0
      %1408 = vmatprep.mubr.f32.mxu0 0.0
      %1409 = vmatmul.mubr.f32.gmra.mrb[0].mxu0 %v698
      %v1410 = vpop.f32.mrb[0].mxu0
      %v1411 = vadd.f32 %v310, %v1410
      %v1412 = vpop.f32.mrb[0].mxu0
      %1413 = vdwg.mxu0
      %1414 = vst.msk [vmem:[%s172] sm:$0xff] %vm312, %v771
      %1415 = vst.msk [vmem:[%s172 + $0x8] sm:$0xff] %vm312, %v776
      %1416 = vst.msk [vmem:[%s172 + $0x10] sm:$0xff] %vm312, %v781
      %1417 = vst.msk [vmem:[%s172 + $0x18] sm:$0xff] %vm312, %v786
      %1418 = vst.msk [vmem:[%s172 + $0x20] sm:$0xff] %vm312, %v791
      %1419 = vst.msk [vmem:[%s172 + $0x28] sm:$0xff] %vm312, %v796
      %1420 = vst.msk [vmem:[%s172 + $0x30] sm:$0xff] %vm312, %v801
      %1421 = vst.msk [vmem:[%s172 + $0x38] sm:$0xff] %vm312, %v806
      %1422 = vst.msk [vmem:[%s172 + $0x40] sm:$0xff] %vm312, %v811
      %1423 = vst.msk [vmem:[%s172 + $0x48] sm:$0xff] %vm312, %v816
      %1424 = vst.msk [vmem:[%s172 + $0x50] sm:$0xff] %vm312, %v821
      %1425 = vst.msk [vmem:[%s172 + $0x58] sm:$0xff] %vm312, %v826
      %1426 = vst.msk [vmem:[%s172 + $0x60] sm:$0xff] %vm312, %v831
      %1427 = vst.msk [vmem:[%s172 + $0x68] sm:$0xff] %vm312, %v836
      %1428 = vst.msk [vmem:[%s172 + $0x70] sm:$0xff] %vm312, %v841
      %1429 = vst.msk [vmem:[%s172 + $0x78] sm:$0xff] %vm312, %v846
      %1430 = vst.msk [vmem:[%s172 + $0x80] sm:$0xff] %vm312, %v851
      %1431 = vst.msk [vmem:[%s172 + $0x88] sm:$0xff] %vm312, %v856
      %1432 = vst.msk [vmem:[%s172 + $0x90] sm:$0xff] %vm312, %v861
      %1433 = vst.msk [vmem:[%s172 + $0x98] sm:$0xff] %vm312, %v866
      %1434 = vst.msk [vmem:[%s172 + $0xa0] sm:$0xff] %vm312, %v871
      %1435 = vst.msk [vmem:[%s172 + $0xa8] sm:$0xff] %vm312, %v876
      %1436 = vst.msk [vmem:[%s172 + $0xb0] sm:$0xff] %vm312, %v881
      %1437 = vst.msk [vmem:[%s172 + $0xb8] sm:$0xff] %vm312, %v886
      %1438 = vst.msk [vmem:[%s172 + $0xc0] sm:$0xff] %vm312, %v891
      %1439 = vst.msk [vmem:[%s172 + $0xc8] sm:$0xff] %vm312, %v896
      %1440 = vst.msk [vmem:[%s172 + $0xd0] sm:$0xff] %vm312, %v901
      %1441 = vst.msk [vmem:[%s172 + $0xd8] sm:$0xff] %vm312, %v906
      %1442 = vst.msk [vmem:[%s172 + $0xe0] sm:$0xff] %vm312, %v911
      %1443 = vst.msk [vmem:[%s172 + $0xe8] sm:$0xff] %vm312, %v916
      %1444 = vst.msk [vmem:[%s172 + $0xf0] sm:$0xff] %vm312, %v921
      %1445 = vst.msk [vmem:[%s172 + $0xf8] sm:$0xff] %vm312, %v926
      %1446 = vst.msk [vmem:[%s172 + $0x100] sm:$0xff] %vm312, %v931
      %1447 = vst.msk [vmem:[%s172 + $0x108] sm:$0xff] %vm312, %v936
      %1448 = vst.msk [vmem:[%s172 + $0x110] sm:$0xff] %vm312, %v941
      %1449 = vst.msk [vmem:[%s172 + $0x118] sm:$0xff] %vm312, %v946
      %1450 = vst.msk [vmem:[%s172 + $0x120] sm:$0xff] %vm312, %v951
      %1451 = vst.msk [vmem:[%s172 + $0x128] sm:$0xff] %vm312, %v956
      %1452 = vst.msk [vmem:[%s172 + $0x130] sm:$0xff] %vm312, %v961
      %1453 = vst.msk [vmem:[%s172 + $0x138] sm:$0xff] %vm312, %v966
      %1454 = vst.msk [vmem:[%s172 + $0x140] sm:$0xff] %vm312, %v971
      %1455 = vst.msk [vmem:[%s172 + $0x148] sm:$0xff] %vm312, %v976
      %1456 = vst.msk [vmem:[%s172 + $0x150] sm:$0xff] %vm312, %v981
      %1457 = vst.msk [vmem:[%s172 + $0x158] sm:$0xff] %vm312, %v986
      %1458 = vst.msk [vmem:[%s172 + $0x160] sm:$0xff] %vm312, %v991
      %1459 = vst.msk [vmem:[%s172 + $0x168] sm:$0xff] %vm312, %v996
      %1460 = vst.msk [vmem:[%s172 + $0x170] sm:$0xff] %vm312, %v1001
      %1461 = vst.msk [vmem:[%s172 + $0x178] sm:$0xff] %vm312, %v1006
      %1462 = vst.msk [vmem:[%s172 + $0x180] sm:$0xff] %vm312, %v1011
      %1463 = vst.msk [vmem:[%s172 + $0x188] sm:$0xff] %vm312, %v1016
      %1464 = vst.msk [vmem:[%s172 + $0x190] sm:$0xff] %vm312, %v1021
      %1465 = vst.msk [vmem:[%s172 + $0x198] sm:$0xff] %vm312, %v1026
      %1466 = vst.msk [vmem:[%s172 + $0x1a0] sm:$0xff] %vm312, %v1031
      %1467 = vst.msk [vmem:[%s172 + $0x1a8] sm:$0xff] %vm312, %v1036
      %1468 = vst.msk [vmem:[%s172 + $0x1b0] sm:$0xff] %vm312, %v1041
      %1469 = vst.msk [vmem:[%s172 + $0x1b8] sm:$0xff] %vm312, %v1046
      %1470 = vst.msk [vmem:[%s172 + $0x1c0] sm:$0xff] %vm312, %v1051
      %1471 = vst.msk [vmem:[%s172 + $0x1c8] sm:$0xff] %vm312, %v1056
      %1472 = vst.msk [vmem:[%s172 + $0x1d0] sm:$0xff] %vm312, %v1061
      %1473 = vst.msk [vmem:[%s172 + $0x1d8] sm:$0xff] %vm312, %v1066
      %1474 = vst.msk [vmem:[%s172 + $0x1e0] sm:$0xff] %vm312, %v1071
      %1475 = vst.msk [vmem:[%s172 + $0x1e8] sm:$0xff] %vm312, %v1076
      %1476 = vst.msk [vmem:[%s172 + $0x1f0] sm:$0xff] %vm312, %v1081
      %1477 = vst.msk [vmem:[%s172 + $0x1f8] sm:$0xff] %vm312, %v1086
      %1478 = vst.msk [vmem:[%s172 + $0x200] sm:$0xff] %vm312, %v1091
      %1479 = vst.msk [vmem:[%s172 + $0x208] sm:$0xff] %vm312, %v1096
      %1480 = vst.msk [vmem:[%s172 + $0x210] sm:$0xff] %vm312, %v1101
      %1481 = vst.msk [vmem:[%s172 + $0x218] sm:$0xff] %vm312, %v1106
      %1482 = vst.msk [vmem:[%s172 + $0x220] sm:$0xff] %vm312, %v1111
      %1483 = vst.msk [vmem:[%s172 + $0x228] sm:$0xff] %vm312, %v1116
      %1484 = vst.msk [vmem:[%s172 + $0x230] sm:$0xff] %vm312, %v1121
      %1485 = vst.msk [vmem:[%s172 + $0x238] sm:$0xff] %vm312, %v1126
      %1486 = vst.msk [vmem:[%s172 + $0x240] sm:$0xff] %vm312, %v1131
      %1487 = vst.msk [vmem:[%s172 + $0x248] sm:$0xff] %vm312, %v1136
      %1488 = vst.msk [vmem:[%s172 + $0x250] sm:$0xff] %vm312, %v1141
      %1489 = vst.msk [vmem:[%s172 + $0x258] sm:$0xff] %vm312, %v1146
      %1490 = vst.msk [vmem:[%s172 + $0x260] sm:$0xff] %vm312, %v1151
      %1491 = vst.msk [vmem:[%s172 + $0x268] sm:$0xff] %vm312, %v1156
      %1492 = vst.msk [vmem:[%s172 + $0x270] sm:$0xff] %vm312, %v1161
      %1493 = vst.msk [vmem:[%s172 + $0x278] sm:$0xff] %vm312, %v1166
      %1494 = vst.msk [vmem:[%s172 + $0x280] sm:$0xff] %vm312, %v1171
      %1495 = vst.msk [vmem:[%s172 + $0x288] sm:$0xff] %vm312, %v1176
      %1496 = vst.msk [vmem:[%s172 + $0x290] sm:$0xff] %vm312, %v1181
      %1497 = vst.msk [vmem:[%s172 + $0x298] sm:$0xff] %vm312, %v1186
      %1498 = vst.msk [vmem:[%s172 + $0x2a0] sm:$0xff] %vm312, %v1191
      %1499 = vst.msk [vmem:[%s172 + $0x2a8] sm:$0xff] %vm312, %v1196
      %1500 = vst.msk [vmem:[%s172 + $0x2b0] sm:$0xff] %vm312, %v1201
      %1501 = vst.msk [vmem:[%s172 + $0x2b8] sm:$0xff] %vm312, %v1206
      %1502 = vst.msk [vmem:[%s172 + $0x2c0] sm:$0xff] %vm312, %v1211
      %1503 = vst.msk [vmem:[%s172 + $0x2c8] sm:$0xff] %vm312, %v1216
      %1504 = vst.msk [vmem:[%s172 + $0x2d0] sm:$0xff] %vm312, %v1221
      %1505 = vst.msk [vmem:[%s172 + $0x2d8] sm:$0xff] %vm312, %v1226
      %1506 = vst.msk [vmem:[%s172 + $0x2e0] sm:$0xff] %vm312, %v1231
      %1507 = vst.msk [vmem:[%s172 + $0x2e8] sm:$0xff] %vm312, %v1236
      %1508 = vst.msk [vmem:[%s172 + $0x2f0] sm:$0xff] %vm312, %v1241
      %1509 = vst.msk [vmem:[%s172 + $0x2f8] sm:$0xff] %vm312, %v1246
      %1510 = vst.msk [vmem:[%s172 + $0x300] sm:$0xff] %vm312, %v1251
      %1511 = vst.msk [vmem:[%s172 + $0x308] sm:$0xff] %vm312, %v1256
      %1512 = vst.msk [vmem:[%s172 + $0x310] sm:$0xff] %vm312, %v1261
      %1513 = vst.msk [vmem:[%s172 + $0x318] sm:$0xff] %vm312, %v1266
      %1514 = vst.msk [vmem:[%s172 + $0x320] sm:$0xff] %vm312, %v1271
      %1515 = vst.msk [vmem:[%s172 + $0x328] sm:$0xff] %vm312, %v1276
      %1516 = vst.msk [vmem:[%s172 + $0x330] sm:$0xff] %vm312, %v1281
      %1517 = vst.msk [vmem:[%s172 + $0x338] sm:$0xff] %vm312, %v1286
      %1518 = vst.msk [vmem:[%s172 + $0x340] sm:$0xff] %vm312, %v1291
      %1519 = vst.msk [vmem:[%s172 + $0x348] sm:$0xff] %vm312, %v1296
      %1520 = vst.msk [vmem:[%s172 + $0x350] sm:$0xff] %vm312, %v1301
      %1521 = vst.msk [vmem:[%s172 + $0x358] sm:$0xff] %vm312, %v1306
      %1522 = vst.msk [vmem:[%s172 + $0x360] sm:$0xff] %vm312, %v1311
      %1523 = vst.msk [vmem:[%s172 + $0x368] sm:$0xff] %vm312, %v1316
      %1524 = vst.msk [vmem:[%s172 + $0x370] sm:$0xff] %vm312, %v1321
      %1525 = vst.msk [vmem:[%s172 + $0x378] sm:$0xff] %vm312, %v1326
      %1526 = vst.msk [vmem:[%s172 + $0x380] sm:$0xff] %vm312, %v1331
      %1527 = vst.msk [vmem:[%s172 + $0x388] sm:$0xff] %vm312, %v1336
      %1528 = vst.msk [vmem:[%s172 + $0x390] sm:$0xff] %vm312, %v1341
      %1529 = vst.msk [vmem:[%s172 + $0x398] sm:$0xff] %vm312, %v1346
      %1530 = vst.msk [vmem:[%s172 + $0x3a0] sm:$0xff] %vm312, %v1351
      %1531 = vst.msk [vmem:[%s172 + $0x3a8] sm:$0xff] %vm312, %v1356
      %1532 = vst.msk [vmem:[%s172 + $0x3b0] sm:$0xff] %vm312, %v1361
      %1533 = vst.msk [vmem:[%s172 + $0x3b8] sm:$0xff] %vm312, %v1366
      %1534 = vst.msk [vmem:[%s172 + $0x3c0] sm:$0xff] %vm312, %v1371
      %1535 = vst.msk [vmem:[%s172 + $0x3c8] sm:$0xff] %vm312, %v1376
      %1536 = vst.msk [vmem:[%s172 + $0x3d0] sm:$0xff] %vm312, %v1381
      %1537 = vst.msk [vmem:[%s172 + $0x3d8] sm:$0xff] %vm312, %v1386
      %1538 = vst.msk [vmem:[%s172 + $0x3e0] sm:$0xff] %vm312, %v1391
      %1539 = vst.msk [vmem:[%s172 + $0x3e8] sm:$0xff] %vm312, %v1396
      %1540 = vst.msk [vmem:[%s172 + $0x3f0] sm:$0xff] %vm312, %v1401
      %1541 = vst.msk [vmem:[%s172 + $0x3f8] sm:$0xff] %vm312, %v1406
      %1542 = vst.msk [vmem:[%s172 + $0x400] sm:$0xff] %vm312, %v1411
      %s1543 = smul.u32 129, %s14
      %p1544 = scmp.lt.s32.totalorder %s1543, 257
      %s1545 = scalar_select %p1544, %s1543, 257
      %s1546 = smul.addr %s1545, 8
      %s1547 = scalar_lea.vmem %s3, %s1546
      // Predicated region
      $region33: #{tpu_custom_call.1} parent=31 // pred_check
        %p1548 = pneg %p100
      $region34: #{tpu_custom_call.1} parent=31 // pred_check_branch
        %1550 = sbr.rel (%p1548) target = $region36
      $region35: #{tpu_custom_call.1} parent=31 // pred_region
        %s1551 = smul.u32 129, %s14
      $region36: #{tpu_custom_call.1} parent=31 // pred_fallthru
        _
    $region32: #{tpu_custom_call.1} parent=5 // pred_fallthru
      _
    %p1552 = scmp.le.s32.totalorder 2, %s9
    // Predicated region
    $region37: #{tpu_custom_call.1} parent=5 // pred_check
      %p1553 = pneg %p1552
    $region38: #{tpu_custom_call.1} parent=5 // pred_check_branch
      %1555 = sbr.rel (%p1553) target = $region40
    $region39: #{tpu_custom_call.1} parent=5 // pred_region
      %s1556 = ssub.s32 %s9, 2
      // Predicated region
      $region41: #{tpu_custom_call.1} parent=39 // pred_check
        %p1557 = pneg %p106
      $region42: #{tpu_custom_call.1} parent=39 // pred_check_branch
        %1559 = sbr.rel (%p1557) target = $region44
      $region43: #{tpu_custom_call.1} parent=39 // pred_region
        %s1560 = smul.u32 129, %s15
        %p1561 = scmp.lt.s32.totalorder %s1560, 257
        %s1562 = scalar_select %p1561, %s1560, 257
        %s1563 = smul.addr %s1562, 8
        %s1564 = scalar_lea.vmem %s3, %s1563
      $region44: #{tpu_custom_call.1} parent=39 // pred_fallthru
        _
    $region40: #{tpu_custom_call.1} parent=5 // pred_fallthru
      _
  $region6: #{tpu_custom_call.1} parent=0 // loop_footer
    %s13 = sadd.s32 1, %s9
  $region7: #{tpu_custom_call.1} parent=0 // loop_footer_branch
    %8 = sbr.rel target = $region3
  $region8: #{tpu_custom_call.1} parent=0 // loop_exit
    _

</llo_original>
